<compile_context>
chip_gen: v7x
topology: tpu7x:2x2x1
jax: 0.10.0
libtpu: 0.0.40
codegen_flags: <defaults>
</compile_context>

<pallas_src>
import functools

import jax
import jax.numpy as jnp
from jax.experimental import pallas as pl
from jax.experimental.pallas import tpu as pltpu


_LANE = 128
_NEG_BIG = -1e30   # finite "−inf": exp underflows to exactly 0, never NaN


def _round_up(x, m):
    return (x + m - 1) // m * m


def _cdiv(a, b):
    return -(-a // b)


def _vmem_capacity_bytes():
    # Generation-aware (v5e/v6e: 128 MiB, v7x: 64 MiB per TC). Fall back to the
    # most conservative figure if the query is unavailable.
    try:
        return int(pltpu.get_tpu_info().vmem_capacity_bytes)
    except Exception:
        return 64 * 1024 * 1024


def _pick_blocks(B, T, S_p, Din, Dsrc, Dout_p, *, act_elt, attn_elt, out_elt,
                 budget_bytes, min_batch_blocks, t_multiple, t_target):
    """Pick the largest (Bt, Tt) block that fits a per-grid-step VMEM budget.

    Prefers a big T tile (MXU row occupancy on the scores/ctx einsums), then
    the biggest batch slab that still leaves >= min_batch_blocks grid steps
    along batch (so both v7x TensorCores get work).
    """
    # Weights are single-buffered (constant index_map + pl.Buffered(1)).
    w_bytes = (Din * Dsrc + Dsrc * Dout_p + Din * Dout_p) * act_elt

    def step_bytes(Bt, Tt):
        enc = Bt * S_p * Dsrc * act_elt * 2          # double-buffered input block
        bias = Bt * S_p * 4 * 2
        inp = Bt * Tt * Din * act_elt * 2
        x_out = Bt * Tt * Dout_p * out_elt * 2
        a_out = Bt * Tt * S_p * attn_elt * 2
        inter = Bt * Tt * (3 * S_p + 2 * Dsrc + 2 * Dout_p) * 4  # scores/e/p, xq/ctx, out
        return w_bytes + enc + bias + inp + x_out + a_out + inter

    T_al = _round_up(T, t_multiple)
    t_cands = sorted({min(T_al, _round_up(t, t_multiple))
                      for t in (t_target, 128, 64, 32, 16, 8)}, reverse=True)
    bt_max = max(1, _cdiv(B, max(1, min(min_batch_blocks, B))))
    for Tt in t_cands:
        for Bt in range(bt_max, 0, -1):
            if step_bytes(Bt, Tt) <= budget_bytes:
                return Bt, Tt
    return 1, t_multiple   # last resort; compiler gets to sort out the rest


def _attention_kernel(inp_ref, enc_ref, bias_ref, w_in_ref, w_ctx_ref, w_inp_ref,
                      x_out_ref, attn_out_ref, *, approx_recip):
    Bt, Tt, Din = inp_ref.shape
    _, S_p, Dsrc = enc_ref.shape
    Dout_p = x_out_ref.shape[-1]

    inp = inp_ref[...]                 # (Bt, Tt, Din)   — f32, or bf16 in fast_math
    enc = enc_ref[...]                 # (Bt, S_p, Dsrc) — f32, or bf16 in fast_math
    mm_dtype = enc.dtype               # MXU operand dtype; accumulation is f32

    # Batch-independent projections flattened to Bt*Tt rows (Tt is a sublane
    # multiple, so the reshape is a free view): one MXU pass per weight tile.
    inp_flat = inp.reshape(Bt * Tt, Din)
    xq = jnp.dot(inp_flat, w_in_ref[...],
                 preferred_element_type=jnp.float32)             # (Bt*Tt, Dsrc)
    out_inp = jnp.dot(inp_flat, w_inp_ref[...],
                      preferred_element_type=jnp.float32)        # (Bt*Tt, Dout_p)

    # Batched attention scores over the slab, f32 accumulation.
    scores = jnp.einsum('btd,bsd->bts',
                        xq.reshape(Bt, Tt, Dsrc).astype(mm_dtype), enc,
                        preferred_element_type=jnp.float32)      # (Bt, Tt, S_p)

    # Additive mask: 0 where valid, -1e30 where padded (incl. the S_p tail).
    scores = scores + bias_ref[...]                              # bias: (Bt, 1, S_p)

    # Softmax over the (padded) source axis — all f32 elementwise.
    m = jnp.max(scores, axis=-1, keepdims=True)
    e = jnp.exp(scores - m)
    denom = jnp.sum(e, axis=-1, keepdims=True)
    if approx_recip:
        p = e * pl.reciprocal(denom, approx=True)                # EUP slot, ~free
    else:
        p = e / denom                                            # exact, matches torch f32

    # context = attn @ enc ; cat((ctx, inp), -1) @ W_out^T
    #   == ctx @ Wt[:Dsrc] + inp @ Wt[Dsrc:]
    ctx = jnp.einsum('bts,bsd->btd', p.astype(mm_dtype), enc,
                     preferred_element_type=jnp.float32)         # (Bt, Tt, Dsrc)
    out = jnp.dot(ctx.reshape(Bt * Tt, Dsrc).astype(mm_dtype), w_ctx_ref[...],
                  preferred_element_type=jnp.float32) + out_inp
    out = jnp.tanh(out).reshape(Bt, Tt, Dout_p)

    # Lane-dense (128-wide) full-vreg stores; padding sliced off in the wrapper.
    x_out_ref[...] = out.astype(x_out_ref.dtype)
    attn_out_ref[...] = p.astype(attn_out_ref.dtype)


def attention_layer(inputs_tm, encoder_outputs_tm, encoder_padding_mask_tm,
                    w_input_proj, w_output_proj, *, fast_math=False,
                    attn_dtype=None, min_batch_blocks=2, t_target=256,
                    vmem_limit_bytes=None):
    """Pallas port of AttentionLayer.forward.

    inputs_tm:               (T, B, Din)   time-major
    encoder_outputs_tm:      (S, B, Dsrc)  time-major
    encoder_padding_mask_tm: (S, B) bool   (True = padding)
    w_input_proj:  (Dsrc, Din)         PyTorch Linear layout, bias=False
    w_output_proj: (Dout, Dsrc + Din)  PyTorch Linear layout, bias=False
    Returns: x (T, B, Dout), attn (B, T, S)  — same as the torch module.
    """
    T, B, Din = inputs_tm.shape
    S, _, Dsrc = encoder_outputs_tm.shape
    Dout = w_output_proj.shape[0]

    # Lane-dense padded sizes for the two output minor dims.
    S_p = _round_up(S, _LANE)
    Dout_p = _round_up(Dout, _LANE)

    act_dtype = jnp.bfloat16 if fast_math else jnp.float32
    act_elt = jnp.dtype(act_dtype).itemsize
    if attn_dtype is None:
        # attn (B,T,S) is the largest writeback: bf16 on the fast path.
        attn_dtype = jnp.bfloat16 if fast_math else jnp.float32
    attn_elt = jnp.dtype(attn_dtype).itemsize
    out_dtype = inputs_tm.dtype
    out_elt = jnp.dtype(out_dtype).itemsize

    # Generation-aware VMEM budget.
    vmem_cap = _vmem_capacity_bytes()
    if vmem_limit_bytes is None:
        vmem_limit_bytes = min(int(vmem_cap * 0.75), 100 * 1024 * 1024)

    # T tile must be a sublane multiple so in-kernel reshapes stay free views.
    t_multiple = 16 if fast_math else 8
    Bt, Tt = _pick_blocks(B, T, S_p, Din, Dsrc, Dout_p,
                          act_elt=act_elt, attn_elt=attn_elt, out_elt=out_elt,
                          budget_bytes=int(vmem_limit_bytes * 0.9),
                          min_batch_blocks=min_batch_blocks,
                          t_multiple=t_multiple, t_target=t_target)
    n_b = _cdiv(B, Bt)
    B_p = n_b * Bt
    n_t = _cdiv(T, Tt)
    T_p = n_t * Tt

    # Layout glue. Batch-first so every block keeps (sublane, lane) aligned.
    # TODO(synk): these wrapper transposes are an extra HBM pass over inputs/enc;
    # a time-major in-kernel layout needs Bt>=8 blocks to stay (8,128)-legal.
    inputs = jnp.transpose(inputs_tm, (1, 0, 2))              # (B, T, Din)
    enc = jnp.transpose(encoder_outputs_tm, (1, 0, 2))        # (B, S, Dsrc)
    mask = jnp.transpose(encoder_padding_mask_tm, (1, 0))     # (B, S)

    # Additive mask bias: 0 where valid, -1e30 where padded; the padded S tail
    # and padded batch rows also get -1e30 so they vanish in the softmax.
    bias = jnp.where(mask, _NEG_BIG, 0.0).astype(jnp.float32)[:, None, :]
    if (B_p, S_p) != (B, S):
        bias = jnp.pad(bias, ((0, B_p - B), (0, 0), (0, S_p - S)),
                       constant_values=_NEG_BIG)              # (B_p, 1, S_p)
    if (B_p, T_p) != (B, T):
        inputs = jnp.pad(inputs, ((0, B_p - B), (0, T_p - T), (0, 0)))
    if (B_p, S_p) != (B, S):
        enc = jnp.pad(enc, ((0, B_p - B), (0, S_p - S), (0, 0)))

    # Linear(y = x W^T): pre-transpose; split output_proj by cat order and
    # zero-pad the output dim to 128 lanes (tanh(0)=0 columns sliced off below).
    w_in_t = jnp.transpose(w_input_proj)                      # (Din, Dsrc)
    w_out_t = jnp.transpose(w_output_proj)                    # (Dsrc+Din, Dout)
    w_ctx = w_out_t[:Dsrc]
    w_inp = w_out_t[Dsrc:]
    if Dout_p != Dout:
        w_ctx = jnp.pad(w_ctx, ((0, 0), (0, Dout_p - Dout)))  # (Dsrc, Dout_p)
        w_inp = jnp.pad(w_inp, ((0, 0), (0, Dout_p - Dout)))  # (Din, Dout_p)

    # fast_math: cast the big operands to bf16 once in HBM (halves DMA bytes and
    # VMEM footprint); no-ops on the exact f32 path.
    inputs = inputs.astype(act_dtype)
    enc = enc.astype(act_dtype)
    w_in_t = w_in_t.astype(act_dtype)
    w_ctx = w_ctx.astype(act_dtype)
    w_inp = w_inp.astype(act_dtype)

    kernel = functools.partial(_attention_kernel, approx_recip=fast_math)

    x_bf, attn = pl.pallas_call(
        kernel,
        out_shape=(
            jax.ShapeDtypeStruct((B_p, T_p, Dout_p), out_dtype),
            jax.ShapeDtypeStruct((B_p, T_p, S_p), attn_dtype),
        ),
        grid_spec=pltpu.PrefetchScalarGridSpec(
            num_scalar_prefetch=0,
            grid=(n_b, n_t),          # t innermost: enc/bias blocks stay resident
            in_specs=[
                pl.BlockSpec((Bt, Tt, Din), lambda b, t: (b, t, 0)),
                pl.BlockSpec((Bt, S_p, Dsrc), lambda b, t: (b, 0, 0)),
                pl.BlockSpec((Bt, 1, S_p), lambda b, t: (b, 0, 0)),
                # Weights: constant index_map + single buffer (no re-DMA, half VMEM).
                pl.BlockSpec((Din, Dsrc), lambda b, t: (0, 0),
                             pipeline_mode=pl.Buffered(1)),
                pl.BlockSpec((Dsrc, Dout_p), lambda b, t: (0, 0),
                             pipeline_mode=pl.Buffered(1)),
                pl.BlockSpec((Din, Dout_p), lambda b, t: (0, 0),
                             pipeline_mode=pl.Buffered(1)),
            ],
            out_specs=[
                pl.BlockSpec((Bt, Tt, Dout_p), lambda b, t: (b, t, 0)),
                pl.BlockSpec((Bt, Tt, S_p), lambda b, t: (b, t, 0)),
            ],
        ),
        compiler_params=pltpu.CompilerParams(
            dimension_semantics=("parallel", "parallel"),
            vmem_limit_bytes=int(vmem_limit_bytes),
        ),
    )(inputs, enc, bias, w_in_t, w_ctx, w_inp)

    # Slice off batch/time/lane padding; x back to time-major (matches module).
    x = jnp.transpose(x_bf[:B, :T, :Dout], (1, 0, 2))         # (T, B, Dout)
    attn = attn[:B, :T, :S]                                   # (B, T, S)
    return x, attn


def _reference(inputs_tm, enc_tm, mask_tm, w_in, w_out):
    inputs = jnp.transpose(inputs_tm, (1, 0, 2))
    enc = jnp.transpose(enc_tm, (1, 0, 2))
    mask = jnp.transpose(mask_tm, (1, 0))
    x = jnp.einsum('btd,sd->bts', inputs, w_in)
    scores = jnp.einsum('bts,bks->btk', x, enc)
    scores = jnp.where(mask[:, None, :], -jnp.inf, scores)
    p = jax.nn.softmax(scores, axis=-1)
    ctx = jnp.einsum('btk,bks->bts', p, enc)
    cat = jnp.concatenate([ctx, inputs], axis=-1)
    out = jnp.tanh(jnp.einsum('btc,oc->bto', cat, w_out))
    return jnp.transpose(out, (1, 0, 2)), p


if __name__ == "__main__":
    # Small shapes implied by the module.
    T, S, B = 8, 16, 2              # tgt_len, src_len, batch
    Din, Dsrc, Dout = 16, 32, 16    # input / source / output embed dims

    key = jax.random.PRNGKey(0)
    k1, k2, k3, k4 = jax.random.split(key, 4)

    inputs_tm = jax.random.normal(k1, (T, B, Din), dtype=jnp.float32)
    enc_tm = jax.random.normal(k2, (S, B, Dsrc), dtype=jnp.float32)

    # Deterministic padding mask: batch 0 no padding, batch 1 pads last 5 steps.
    pad_lens = jnp.array([0, 5], dtype=jnp.int32)
    pos = jnp.arange(S)[:, None]                                   # (S, 1)
    mask_tm = pos >= (S - pad_lens)[None, :]                       # (S, B) bool

    # PyTorch layout: (out_features, in_features), bias=False.
    w_input_proj = 0.1 * jax.random.normal(k3, (Dsrc, Din), dtype=jnp.float32)
    w_output_proj = 0.1 * jax.random.normal(k4, (Dout, Din + Dsrc), dtype=jnp.float32)

    x_ref, attn_ref = _reference(inputs_tm, enc_tm, mask_tm,
                                 w_input_proj, w_output_proj)

    # Exact path (f32 on the MXU): faithful to the torch module's f32 math.
    x_out, attn_out = attention_layer(inputs_tm, enc_tm, mask_tm,
                                      w_input_proj, w_output_proj,
                                      fast_math=False)
    jax.block_until_ready((x_out, attn_out))
    assert x_out.shape == (T, B, Dout) and attn_out.shape == (B, T, S)
    assert jnp.allclose(x_out, x_ref, atol=1e-5, rtol=1e-5)
    assert jnp.allclose(attn_out, attn_ref, atol=1e-5, rtol=1e-5)

    # Fast path: bf16 operands cast once in HBM, bf16 attn writeback, and
    # approx-reciprocal softmax normalization; elementwise math stays f32.
    x_fast, attn_fast = attention_layer(inputs_tm, enc_tm, mask_tm,
                                        w_input_proj, w_output_proj,
                                        fast_math=True)
    jax.block_until_ready((x_fast, attn_fast))
    assert jnp.allclose(x_fast, x_ref, atol=3e-2, rtol=3e-2)
    assert jnp.allclose(attn_fast.astype(jnp.float32), attn_ref, atol=3e-2, rtol=3e-2)

    print("KERNEL_OK")
</pallas_src>

<mosaic_0001>
module attributes {stable_mosaic.version = 11 : i64} {
  func.func @_attention_kernel(%arg0: i32, %arg1: i32, %arg2: memref<1x8x16xf32, #tpu.memory_space<vmem>>, %arg3: memref<1x128x32xf32, #tpu.memory_space<vmem>>, %arg4: memref<1x1x128xf32, #tpu.memory_space<vmem>>, %arg5: memref<16x32xf32, #tpu.memory_space<vmem>>, %arg6: memref<32x128xf32, #tpu.memory_space<vmem>>, %arg7: memref<16x128xf32, #tpu.memory_space<vmem>>, %arg8: memref<1x8x128xf32, #tpu.memory_space<vmem>>, %arg9: memref<1x8x128xf32, #tpu.memory_space<vmem>>) attributes {dimension_semantics = [#tpu.dimension_semantics<parallel>, #tpu.dimension_semantics<parallel>], iteration_bounds = array<i64: 2, 1>, scalar_prefetch = 0 : i64, scratch_operands = 0 : i64, tpu.core_type = #tpu.core_type<tc>, window_params = [{transform_indices = @transform_0, window_bounds = array<i64: 1, 8, 16>}, {transform_indices = @transform_1, window_bounds = array<i64: 1, 128, 32>}, {transform_indices = @transform_2, window_bounds = array<i64: 1, 1, 128>}, {pipeline_mode = #tpu.pipeline_mode<synchronous>, transform_indices = @transform_3, window_bounds = array<i64: 16, 32>}, {pipeline_mode = #tpu.pipeline_mode<synchronous>, transform_indices = @transform_4, window_bounds = array<i64: 32, 128>}, {pipeline_mode = #tpu.pipeline_mode<synchronous>, transform_indices = @transform_5, window_bounds = array<i64: 16, 128>}, {transform_indices = @transform_6, window_bounds = array<i64: 1, 8, 128>}, {transform_indices = @transform_7, window_bounds = array<i64: 1, 8, 128>}]} {
    %c0 = arith.constant 0 : index
    %c0_0 = arith.constant 0 : index
    %c0_1 = arith.constant 0 : index
    %0 = vector.load %arg2[%c0, %c0_0, %c0_1] : memref<1x8x16xf32, #tpu.memory_space<vmem>>, vector<1x8x16xf32>
    %c0_2 = arith.constant 0 : index
    %c0_3 = arith.constant 0 : index
    %c0_4 = arith.constant 0 : index
    %1 = vector.load %arg3[%c0_2, %c0_3, %c0_4] : memref<1x128x32xf32, #tpu.memory_space<vmem>>, vector<1x128x32xf32>
    %2 = vector.shape_cast %0 : vector<1x8x16xf32> to vector<8x16xf32>
    %c0_5 = arith.constant 0 : index
    %c0_6 = arith.constant 0 : index
    %3 = vector.load %arg5[%c0_5, %c0_6] : memref<16x32xf32, #tpu.memory_space<vmem>>, vector<16x32xf32>
    %cst = arith.constant dense<0.000000e+00> : vector<8x32xf32>
    %4 = tpu.matmul %2, %3, %cst {dimension_numbers = #tpu.dot_dimension_numbers<[1], [0], [0], [1], [0, 0, 1, 1], [], []>} : vector<8x16xf32>, vector<16x32xf32>, vector<8x32xf32> -> vector<8x32xf32>
    %c0_7 = arith.constant 0 : index
    %c0_8 = arith.constant 0 : index
    %5 = vector.load %arg7[%c0_7, %c0_8] : memref<16x128xf32, #tpu.memory_space<vmem>>, vector<16x128xf32>
    %cst_9 = arith.constant dense<0.000000e+00> : vector<8x128xf32>
    %6 = tpu.matmul %2, %5, %cst_9 {dimension_numbers = #tpu.dot_dimension_numbers<[1], [0], [0], [1], [0, 0, 1, 1], [], []>} : vector<8x16xf32>, vector<16x128xf32>, vector<8x128xf32> -> vector<8x128xf32>
    %7 = vector.shape_cast %4 : vector<8x32xf32> to vector<1x8x32xf32>
    "tpu.trace_start"() <{level = 10 : i32, message = "btd,bsd->bts"}> : () -> ()
    %cst_10 = arith.constant dense<0.000000e+00> : vector<1x8x128xf32>
    %8 = tpu.matmul %7, %1, %cst_10 {dimension_numbers = #tpu.dot_dimension_numbers<[2], [2], [1], [1], [0, 0, 0, 1, 1, 1], [0], [0]>} : vector<1x8x32xf32>, vector<1x128x32xf32>, vector<1x8x128xf32> -> vector<1x8x128xf32>
    "tpu.trace_stop"() : () -> ()
    %c0_11 = arith.constant 0 : index
    %c0_12 = arith.constant 0 : index
    %c0_13 = arith.constant 0 : index
    %9 = vector.load %arg4[%c0_11, %c0_12, %c0_13] : memref<1x1x128xf32, #tpu.memory_space<vmem>>, vector<1x1x128xf32>
    %10 = vector.broadcast %9 : vector<1x1x128xf32> to vector<1x8x128xf32>
    %11 = arith.addf %8, %10 : vector<1x8x128xf32>
    %cst_14 = arith.constant dense<0xFF800000> : vector<1x8xf32>
    %12 = vector.multi_reduction <maximumf>, %11, %cst_14 [2] : vector<1x8x128xf32> to vector<1x8xf32>
    %13 = vector.shape_cast %12 : vector<1x8xf32> to vector<1x8x1xf32>
    %14 = vector.broadcast %13 : vector<1x8x1xf32> to vector<1x8x128xf32>
    %15 = arith.subf %11, %14 : vector<1x8x128xf32>
    %16 = math.exp %15 : vector<1x8x128xf32>
    %cst_15 = arith.constant dense<0.000000e+00> : vector<1x8xf32>
    %17 = vector.multi_reduction <add>, %16, %cst_15 [2] : vector<1x8x128xf32> to vector<1x8xf32>
    %18 = vector.shape_cast %17 : vector<1x8xf32> to vector<1x8x1xf32>
    %19 = vector.broadcast %18 : vector<1x8x1xf32> to vector<1x8x128xf32>
    %20 = arith.divf %16, %19 : vector<1x8x128xf32>
    "tpu.trace_start"() <{level = 10 : i32, message = "bts,bsd->btd"}> : () -> ()
    %cst_16 = arith.constant dense<0.000000e+00> : vector<1x8x32xf32>
    %21 = tpu.matmul %20, %1, %cst_16 {dimension_numbers = #tpu.dot_dimension_numbers<[2], [1], [1], [2], [0, 0, 0, 1, 1, 2], [0], [0]>} : vector<1x8x128xf32>, vector<1x128x32xf32>, vector<1x8x32xf32> -> vector<1x8x32xf32>
    "tpu.trace_stop"() : () -> ()
    %22 = vector.shape_cast %21 : vector<1x8x32xf32> to vector<8x32xf32>
    %c0_17 = arith.constant 0 : index
    %c0_18 = arith.constant 0 : index
    %23 = vector.load %arg6[%c0_17, %c0_18] : memref<32x128xf32, #tpu.memory_space<vmem>>, vector<32x128xf32>
    %cst_19 = arith.constant dense<0.000000e+00> : vector<8x128xf32>
    %24 = tpu.matmul %22, %23, %cst_19 {dimension_numbers = #tpu.dot_dimension_numbers<[1], [0], [0], [1], [0, 0, 1, 1], [], []>} : vector<8x32xf32>, vector<32x128xf32>, vector<8x128xf32> -> vector<8x128xf32>
    %25 = arith.addf %24, %6 : vector<8x128xf32>
    %26 = math.tanh %25 : vector<8x128xf32>
    %27 = vector.shape_cast %26 : vector<8x128xf32> to vector<1x8x128xf32>
    %c0_20 = arith.constant 0 : index
    %c0_21 = arith.constant 0 : index
    %c0_22 = arith.constant 0 : index
    %28 = vector.load %arg8[%c0_20, %c0_21, %c0_22] : memref<1x8x128xf32, #tpu.memory_space<vmem>>, vector<1x8x128xf32>
    tpu.vector_store %arg8[%c0_20, %c0_21, %c0_22], %27 {strides = array<i32>} : memref<1x8x128xf32, #tpu.memory_space<vmem>>, vector<1x8x128xf32>,
    %c0_23 = arith.constant 0 : index
    %c0_24 = arith.constant 0 : index
    %c0_25 = arith.constant 0 : index
    %29 = vector.load %arg9[%c0_23, %c0_24, %c0_25] : memref<1x8x128xf32, #tpu.memory_space<vmem>>, vector<1x8x128xf32>
    tpu.vector_store %arg9[%c0_23, %c0_24, %c0_25], %20 {strides = array<i32>} : memref<1x8x128xf32, #tpu.memory_space<vmem>>, vector<1x8x128xf32>,
    return
  }
  func.func @transform_0(%arg0: i32, %arg1: i32) -> (i32, i32, i32) {
    %c0_i32 = arith.constant 0 : i32
    %c0_i32_0 = arith.constant 0 : i32
    return %arg0, %arg1, %c0_i32 : i32, i32, i32
  }
  func.func @transform_1(%arg0: i32, %arg1: i32) -> (i32, i32, i32) {
    %c0_i32 = arith.constant 0 : i32
    %c0_i32_0 = arith.constant 0 : i32
    %c0_i32_1 = arith.constant 0 : i32
    return %arg0, %c0_i32, %c0_i32_0 : i32, i32, i32
  }
  func.func @transform_2(%arg0: i32, %arg1: i32) -> (i32, i32, i32) {
    %c0_i32 = arith.constant 0 : i32
    %c0_i32_0 = arith.constant 0 : i32
    %c0_i32_1 = arith.constant 0 : i32
    return %arg0, %c0_i32, %c0_i32_0 : i32, i32, i32
  }
  func.func @transform_3(%arg0: i32, %arg1: i32) -> (i32, i32) {
    %c0_i32 = arith.constant 0 : i32
    %c0_i32_0 = arith.constant 0 : i32
    %c0_i32_1 = arith.constant 0 : i32
    return %c0_i32, %c0_i32_0 : i32, i32
  }
  func.func @transform_4(%arg0: i32, %arg1: i32) -> (i32, i32) {
    %c0_i32 = arith.constant 0 : i32
    %c0_i32_0 = arith.constant 0 : i32
    %c0_i32_1 = arith.constant 0 : i32
    return %c0_i32, %c0_i32_0 : i32, i32
  }
  func.func @transform_5(%arg0: i32, %arg1: i32) -> (i32, i32) {
    %c0_i32 = arith.constant 0 : i32
    %c0_i32_0 = arith.constant 0 : i32
    %c0_i32_1 = arith.constant 0 : i32
    return %c0_i32, %c0_i32_0 : i32, i32
  }
  func.func @transform_6(%arg0: i32, %arg1: i32) -> (i32, i32, i32) {
    %c0_i32 = arith.constant 0 : i32
    %c0_i32_0 = arith.constant 0 : i32
    return %arg0, %arg1, %c0_i32 : i32, i32, i32
  }
  func.func @transform_7(%arg0: i32, %arg1: i32) -> (i32, i32, i32) {
    %c0_i32 = arith.constant 0 : i32
    %c0_i32_0 = arith.constant 0 : i32
    return %arg0, %arg1, %c0_i32 : i32, i32, i32
  }
}

</mosaic_0001>

<llo_original>
// kernel: tpu_custom_call.1
$region0: #{tpu_custom_call.1}
  #allocation0 [shape = 'u32[]', space=smem, size = 0x4, offset = 0x4, fixed_abs, tag = 'smem constant byte address 0x4 - core index']
  #allocation1 [shape = 'u32[144,128]{1,0:T(1,128)}', space=vmem, size = 0x12000, scoped, tag = 'internal scratch']
  %s0 = inlined_call_operand.vmem [shape: f32[2,8,16], index: 0, kind: input, shape index: {}]
  %s1 = inlined_call_operand.vmem [shape: f32[2,128,32], index: 1, kind: input, shape index: {}]
  %s2 = inlined_call_operand.vmem [shape: f32[2,1,128], index: 2, kind: input, shape index: {}]
  %s3 = inlined_call_operand.vmem [shape: f32[16,32], index: 3, kind: input, shape index: {}]
  %s4 = inlined_call_operand.vmem [shape: f32[32,128], index: 4, kind: input, shape index: {}]
  %s5 = inlined_call_operand.vmem [shape: f32[16,128], index: 5, kind: input, shape index: {}]
  %s6 = inlined_call_operand.hbm [shape: f32[2,8,128], index: 6, kind: output, shape index: {0}]
  %s7 = inlined_call_operand.hbm [shape: f32[2,8,128], index: 7, kind: output, shape index: {1}]
  %8 = xla_tuple %s6, %s7
  %s9 = sld [smem:[#allocation0]]
  $region65: #{tpu_custom_call.1} parent=0
    _
  %s11 = ssub.s32 1, %s9
  %s12 = scalar_select 0, %s11, %s9
  $region1: #{tpu_custom_call.1} parent=0
    #allocation2 [shape = 'u8[8192]{0}', space=vmem, size = 0x2000, scoped, tag = 'output window, operand 0']
    #allocation3 [shape = 's32[2]{0}', space=sflag, size = 0x8, scoped, tag = 'scoped memory for tpu_custom_call.1']
    #allocation4 [shape = 'u8[8192]{0}', space=vmem, size = 0x2000, scoped, tag = 'output window, operand 1']
    #allocation5 [shape = 's32[2]{0}', space=sflag, size = 0x8, scoped, tag = 'scoped memory for tpu_custom_call.1']
    %13 = vsyncpa [#allocation3], 0
    %s14 = scalar_lea.sflag [#allocation3], 1
    %15 = vsyncpa %s14, 0
    %16 = vsyncpa [#allocation5], 0
    %s17 = scalar_lea.sflag [#allocation5], 1
    %18 = vsyncpa %s17, 0
    loop: start=0, step=1, limit=4
    $region2: #{tpu_custom_call.1} parent=1 // loop_pre_header
      _
    $region3: #{tpu_custom_call.1} parent=1 // loop_header
      %s20 = sphi 0, %s24
      %p21 = scmp.ge.s32.totalorder %s20, 4
      %s27 = sphi 0, %s39
      %s28 = sphi 0, %s35
      %s29 = sphi 0, %s27
      %s30 = sphi 0, %s28
      %s31 = sphi 0, %s29
      %s32 = sphi 0, %s30
      %s44 = sphi 0, %s46
      %s47 = sphi 0, %s44
      %s48 = sphi 0, %s47
      %s64 = sphi 0, %s48
      %s70 = sphi 0, %s72
      %s73 = sphi 0, %s70
      %s74 = sphi 0, %s73
      %s90 = sphi 0, %s74
      %s96 = sphi 0, %s98
      %s99 = sphi 0, %s96
      %s100 = sphi 0, %s99
      %s116 = sphi 0, %s100
      %s120 = sphi 0, %s120
      %s122 = sphi 0, %s120
      %s123 = sphi 0, %s122
      %s137 = sphi 0, %s123
      %s141 = sphi 0, %s141
      %s143 = sphi 0, %s141
      %s144 = sphi 0, %s143
      %s158 = sphi 0, %s144
      %s162 = sphi 0, %s162
      %s164 = sphi 0, %s162
      %s165 = sphi 0, %s164
      %s179 = sphi 0, %s165
      %s187 = sphi 0, %s189
      %s190 = sphi 0, %s187
      %s191 = sphi 0, %s190
      %s207 = sphi 0, %s191
      %s215 = sphi 0, %s217
      %s218 = sphi 0, %s215
      %s219 = sphi 0, %s218
      %s235 = sphi 0, %s219
    $region4: #{tpu_custom_call.1} parent=1 // loop_header_branch
      %23 = sbr.rel (%p21) target = $region8
    $region5: #{tpu_custom_call.1} parent=1 // loop_body
      %s25 = ssub.s32 %s20, 1
      %s26 = ssub.s32 %s20, 2
      %s33 = sadd.s32 1, %s28
      %p34 = scmp.ge.s32.totalorder %s33, 1
      %s35 = scalar_select %p34, 0, %s33
      %s36 = sadd.s32 1, %s27
      %s37 = scalar_select %p34, %s36, %s27
      %p38 = scmp.ge.s32.totalorder %s37, 2
      %s39 = scalar_select %p38, 0, %s37
      %s40 = ssub.s32 %s27, %s39
      %s41 = ssub.s32 %s28, %s35
      %s42 = sor.u32 %s40, %s41
      %p43 = scmp.eq.s32.totalorder %s42, 0
      %s45 = sadd.s32 %s44, 1
      %s46 = scalar_select %p43, %s44, %s45
      %p49 = pneg %p43
      %p50 = scmp.eq.s32.totalorder %s20, 1
      %p51 = por %p49, %p50
      %p52 = scmp.ne.s32.totalorder %s44, %s47
      %p53 = scmp.eq.s32.totalorder %s20, 0
      %p54 = por %p52, %p53
      %p55 = scmp.ne.s32.totalorder %s44, %s47
      %p56 = scmp.eq.s32.totalorder %s25, 1
      %p57 = por %p55, %p56
      %p58 = scmp.ne.s32.totalorder %s47, %s48
      %p59 = scmp.eq.s32.totalorder %s25, 0
      %p60 = por %p58, %p59
      %p61 = scmp.ne.s32.totalorder %s47, %s48
      %p62 = scmp.eq.s32.totalorder %s26, 1
      %p63 = por %p61, %p62
      %p65 = scmp.ne.s32.totalorder %s48, %s64
      %p66 = scmp.eq.s32.totalorder %s26, 0
      %p67 = por %p65, %p66
      %s68 = ssub.s32 %s27, %s39
      %p69 = scmp.eq.s32.totalorder %s68, 0
      %s71 = sadd.s32 %s70, 1
      %s72 = scalar_select %p69, %s70, %s71
      %p75 = pneg %p69
      %p76 = scmp.eq.s32.totalorder %s20, 1
      %p77 = por %p75, %p76
      %p78 = scmp.ne.s32.totalorder %s70, %s73
      %p79 = scmp.eq.s32.totalorder %s20, 0
      %p80 = por %p78, %p79
      %p81 = scmp.ne.s32.totalorder %s70, %s73
      %p82 = scmp.eq.s32.totalorder %s25, 1
      %p83 = por %p81, %p82
      %p84 = scmp.ne.s32.totalorder %s73, %s74
      %p85 = scmp.eq.s32.totalorder %s25, 0
      %p86 = por %p84, %p85
      %p87 = scmp.ne.s32.totalorder %s73, %s74
      %p88 = scmp.eq.s32.totalorder %s26, 1
      %p89 = por %p87, %p88
      %p91 = scmp.ne.s32.totalorder %s74, %s90
      %p92 = scmp.eq.s32.totalorder %s26, 0
      %p93 = por %p91, %p92
      %s94 = ssub.s32 %s27, %s39
      %p95 = scmp.eq.s32.totalorder %s94, 0
      %s97 = sadd.s32 %s96, 1
      %s98 = scalar_select %p95, %s96, %s97
      %p101 = pneg %p95
      %p102 = scmp.eq.s32.totalorder %s20, 1
      %p103 = por %p101, %p102
      %p104 = scmp.ne.s32.totalorder %s96, %s99
      %p105 = scmp.eq.s32.totalorder %s20, 0
      %p106 = por %p104, %p105
      %p107 = scmp.ne.s32.totalorder %s96, %s99
      %p108 = scmp.eq.s32.totalorder %s25, 1
      %p109 = por %p107, %p108
      %p110 = scmp.ne.s32.totalorder %s99, %s100
      %p111 = scmp.eq.s32.totalorder %s25, 0
      %p112 = por %p110, %p111
      %p113 = scmp.ne.s32.totalorder %s99, %s100
      %p114 = scmp.eq.s32.totalorder %s26, 1
      %p115 = por %p113, %p114
      %p117 = scmp.ne.s32.totalorder %s100, %s116
      %p118 = scmp.eq.s32.totalorder %s26, 0
      %p119 = por %p117, %p118
      %s121 = sadd.s32 %s120, 1
      %p124 = scmp.eq.s32.totalorder %s20, 1
      %p125 = scmp.ne.s32.totalorder %s120, %s122
      %p126 = scmp.eq.s32.totalorder %s20, 0
      %p127 = por %p125, %p126
      %p128 = scmp.ne.s32.totalorder %s120, %s122
      %p129 = scmp.eq.s32.totalorder %s25, 1
      %p130 = por %p128, %p129
      %p131 = scmp.ne.s32.totalorder %s122, %s123
      %p132 = scmp.eq.s32.totalorder %s25, 0
      %p133 = por %p131, %p132
      %p134 = scmp.ne.s32.totalorder %s122, %s123
      %p135 = scmp.eq.s32.totalorder %s26, 1
      %p136 = por %p134, %p135
      %p138 = scmp.ne.s32.totalorder %s123, %s137
      %p139 = scmp.eq.s32.totalorder %s26, 0
      %p140 = por %p138, %p139
      %s142 = sadd.s32 %s141, 1
      %p145 = scmp.eq.s32.totalorder %s20, 1
      %p146 = scmp.ne.s32.totalorder %s141, %s143
      %p147 = scmp.eq.s32.totalorder %s20, 0
      %p148 = por %p146, %p147
      %p149 = scmp.ne.s32.totalorder %s141, %s143
      %p150 = scmp.eq.s32.totalorder %s25, 1
      %p151 = por %p149, %p150
      %p152 = scmp.ne.s32.totalorder %s143, %s144
      %p153 = scmp.eq.s32.totalorder %s25, 0
      %p154 = por %p152, %p153
      %p155 = scmp.ne.s32.totalorder %s143, %s144
      %p156 = scmp.eq.s32.totalorder %s26, 1
      %p157 = por %p155, %p156
      %p159 = scmp.ne.s32.totalorder %s144, %s158
      %p160 = scmp.eq.s32.totalorder %s26, 0
      %p161 = por %p159, %p160
      %s163 = sadd.s32 %s162, 1
      %p166 = scmp.eq.s32.totalorder %s20, 1
      %p167 = scmp.ne.s32.totalorder %s162, %s164
      %p168 = scmp.eq.s32.totalorder %s20, 0
      %p169 = por %p167, %p168
      %p170 = scmp.ne.s32.totalorder %s162, %s164
      %p171 = scmp.eq.s32.totalorder %s25, 1
      %p172 = por %p170, %p171
      %p173 = scmp.ne.s32.totalorder %s164, %s165
      %p174 = scmp.eq.s32.totalorder %s25, 0
      %p175 = por %p173, %p174
      %p176 = scmp.ne.s32.totalorder %s164, %s165
      %p177 = scmp.eq.s32.totalorder %s26, 1
      %p178 = por %p176, %p177
      %p180 = scmp.ne.s32.totalorder %s165, %s179
      %p181 = scmp.eq.s32.totalorder %s26, 0
      %p182 = por %p180, %p181
      %s183 = ssub.s32 %s27, %s39
      %s184 = ssub.s32 %s28, %s35
      %s185 = sor.u32 %s183, %s184
      %p186 = scmp.eq.s32.totalorder %s185, 0
      %s188 = sadd.s32 %s187, 1
      %s189 = scalar_select %p186, %s187, %s188
      %p192 = pneg %p186
      %p193 = scmp.eq.s32.totalorder %s20, 1
      %p194 = por %p192, %p193
      %p195 = scmp.ne.s32.totalorder %s187, %s190
      %p196 = scmp.eq.s32.totalorder %s20, 0
      %p197 = por %p195, %p196
      %p198 = scmp.ne.s32.totalorder %s187, %s190
      %p199 = scmp.eq.s32.totalorder %s25, 1
      %p200 = por %p198, %p199
      %p201 = scmp.ne.s32.totalorder %s190, %s191
      %p202 = scmp.eq.s32.totalorder %s25, 0
      %p203 = por %p201, %p202
      %p204 = scmp.ne.s32.totalorder %s190, %s191
      %p205 = scmp.eq.s32.totalorder %s26, 1
      %p206 = por %p204, %p205
      %p208 = scmp.ne.s32.totalorder %s191, %s207
      %p209 = scmp.eq.s32.totalorder %s26, 0
      %p210 = por %p208, %p209
      %s211 = ssub.s32 %s27, %s39
      %s212 = ssub.s32 %s28, %s35
      %s213 = sor.u32 %s211, %s212
      %p214 = scmp.eq.s32.totalorder %s213, 0
      %s216 = sadd.s32 %s215, 1
      %s217 = scalar_select %p214, %s215, %s216
      %p220 = pneg %p214
      %p221 = scmp.eq.s32.totalorder %s20, 1
      %p222 = por %p220, %p221
      %p223 = scmp.ne.s32.totalorder %s215, %s218
      %p224 = scmp.eq.s32.totalorder %s20, 0
      %p225 = por %p223, %p224
      %p226 = scmp.ne.s32.totalorder %s215, %s218
      %p227 = scmp.eq.s32.totalorder %s25, 1
      %p228 = por %p226, %p227
      %p229 = scmp.ne.s32.totalorder %s218, %s219
      %p230 = scmp.eq.s32.totalorder %s25, 0
      %p231 = por %p229, %p230
      %p232 = scmp.ne.s32.totalorder %s218, %s219
      %p233 = scmp.eq.s32.totalorder %s26, 1
      %p234 = por %p232, %p233
      %p236 = scmp.ne.s32.totalorder %s219, %s235
      %p237 = scmp.eq.s32.totalorder %s26, 0
      %p238 = por %p236, %p237
      %p239 = scmp.le.s32.totalorder 1, %s20
      %p240 = scmp.lt.s32.totalorder %s20, 3
      %p241 = pnand %p239, %p240
      %p242 = pneg %p241
      // Predicated region
      $region9: #{tpu_custom_call.1} parent=5 // pred_check
        _
      $region10: #{tpu_custom_call.1} parent=5 // pred_check_branch
        %244 = sbr.rel (%p241) target = $region12
      $region11: #{tpu_custom_call.1} parent=5 // pred_region
        %s245 = ssub.s32 %s20, 1
        // Predicated region
        $region13: #{tpu_custom_call.1} parent=11 // pred_check
          %p246 = pneg %p133
        $region14: #{tpu_custom_call.1} parent=11 // pred_check_branch
          %248 = sbr.rel (%p246) target = $region16
        $region15: #{tpu_custom_call.1} parent=11 // pred_region
          _
        $region16: #{tpu_custom_call.1} parent=11 // pred_fallthru
          _
        // Predicated region
        $region17: #{tpu_custom_call.1} parent=11 // pred_check
          %p249 = pneg %p154
        $region18: #{tpu_custom_call.1} parent=11 // pred_check_branch
          %251 = sbr.rel (%p249) target = $region20
        $region19: #{tpu_custom_call.1} parent=11 // pred_region
          _
        $region20: #{tpu_custom_call.1} parent=11 // pred_fallthru
          _
        // Predicated region
        $region21: #{tpu_custom_call.1} parent=11 // pred_check
          %p252 = pneg %p175
        $region22: #{tpu_custom_call.1} parent=11 // pred_check_branch
          %254 = sbr.rel (%p252) target = $region24
        $region23: #{tpu_custom_call.1} parent=11 // pred_region
          _
        $region24: #{tpu_custom_call.1} parent=11 // pred_fallthru
          _
      $region12: #{tpu_custom_call.1} parent=5 // pred_fallthru
        _
      %p255 = scmp.lt.s32.totalorder %s20, 2
      // Predicated region
      $region25: #{tpu_custom_call.1} parent=5 // pred_check
        %p256 = pneg %p255
      $region26: #{tpu_custom_call.1} parent=5 // pred_check_branch
        %258 = sbr.rel (%p256) target = $region28
      $region27: #{tpu_custom_call.1} parent=5 // pred_region
        // Predicated region
        $region29: #{tpu_custom_call.1} parent=27 // pred_check
          %p259 = pneg %p54
        $region30: #{tpu_custom_call.1} parent=27 // pred_check_branch
          %261 = sbr.rel (%p259) target = $region32
        $region31: #{tpu_custom_call.1} parent=27 // pred_region
          %p262 = scmp.lt.s32.totalorder %s27, 1
          %s263 = scalar_select %p262, %s27, 1
          %p264 = scmp.lt.s32.totalorder %s28, 0
          %s265 = scalar_select %p264, %s28, 0
          %s266 = sadd.s32 %s265, %s263
          %s267 = smul.addr %s266, 8
          %s268 = scalar_lea.vmem %s0, %s267
        $region32: #{tpu_custom_call.1} parent=27 // pred_fallthru
          _
        // Predicated region
        $region33: #{tpu_custom_call.1} parent=27 // pred_check
          %p269 = pneg %p80
        $region34: #{tpu_custom_call.1} parent=27 // pred_check_branch
          %271 = sbr.rel (%p269) target = $region36
        $region35: #{tpu_custom_call.1} parent=27 // pred_region
          %p272 = scmp.lt.s32.totalorder %s27, 1
          %s273 = scalar_select %p272, %s27, 1
          %s274 = smul.addr %s273, 16
          %s275 = smul.addr %s274, 8
          %s276 = scalar_lea.vmem %s1, %s275
        $region36: #{tpu_custom_call.1} parent=27 // pred_fallthru
          _
        // Predicated region
        $region37: #{tpu_custom_call.1} parent=27 // pred_check
          %p277 = pneg %p106
        $region38: #{tpu_custom_call.1} parent=27 // pred_check_branch
          %279 = sbr.rel (%p277) target = $region40
        $region39: #{tpu_custom_call.1} parent=27 // pred_region
          %p280 = scmp.lt.s32.totalorder %s27, 1
          %s281 = scalar_select %p280, %s27, 1
          %s282 = scalar_lea.vmem %s2, %s281
        $region40: #{tpu_custom_call.1} parent=27 // pred_fallthru
          _
      $region28: #{tpu_custom_call.1} parent=5 // pred_fallthru
        _
      %p283 = scmp.le.s32.totalorder 1, %s20
      %p284 = scmp.lt.s32.totalorder %s20, 3
      %p285 = pnand %p283, %p284
      %p286 = pneg %p285
      // Predicated region
      $region41: #{tpu_custom_call.1} parent=5 // pred_check
        _
      $region42: #{tpu_custom_call.1} parent=5 // pred_check_branch
        %288 = sbr.rel (%p285) target = $region44
      $region43: #{tpu_custom_call.1} parent=5 // pred_region
        %s289 = ssub.s32 %s20, 1
        %p290 = scmp.lt.s32.totalorder %s29, 1
        %s291 = scalar_select %p290, %s29, 1
        %p292 = scmp.lt.s32.totalorder %s30, 0
        %s293 = scalar_select %p292, %s30, 0
        %s294 = sadd.s32 %s293, %s291
        %s295 = smul.addr %s294, 8
        %s296 = scalar_lea.vmem %s0, %s295
        %p297 = pneg %p60
        %p298 = pneg %p57
        %p299 = scmp.lt.s32.totalorder %s29, 1
        %s300 = scalar_select %p299, %s29, 1
        %s301 = smul.addr %s300, 16
        %s302 = smul.addr %s301, 8
        %s303 = scalar_lea.vmem %s1, %s302
        %p304 = pneg %p86
        %p305 = pneg %p83
        %p306 = scmp.lt.s32.totalorder %s29, 1
        %s307 = scalar_select %p306, %s29, 1
        %s308 = scalar_lea.vmem %s2, %s307
        %p309 = pneg %p112
        %p310 = pneg %p109
        %p311 = pneg %p133
        %p312 = pneg %p130
        %p313 = pneg %p154
        %p314 = pneg %p151
        %p315 = pneg %p175
        %p316 = pneg %p172
        %p317 = pneg %p203
        %p318 = pneg %p200
        %s319 = sand.u32 %s190, 1
        %s320 = scalar_lea.sflag [#allocation3], %s319
        %s321 = sand.u32 %s190, 1
        %s322 = smul.addr %s321, 8
        %s323 = scalar_lea.vmem [#allocation2], %s322
        %p324 = pneg %p231
        %p325 = pneg %p228
        %s326 = sand.u32 %s218, 1
        %s327 = scalar_lea.sflag [#allocation5], %s326
        %s328 = sand.u32 %s218, 1
        %s329 = smul.addr %s328, 8
        %s330 = scalar_lea.vmem [#allocation4], %s329
        %p331 = scmp.lt.s32.totalorder %s29, 1
        %s332 = scalar_select %p331, %s29, 1
        %p333 = scmp.lt.s32.totalorder %s30, 0
        %s334 = scalar_select %p333, %s30, 0
        %s335 = sadd.s32 %s334, %s332
        %s336 = smul.addr %s335, 8
        %s337 = scalar_lea.vmem %s0, %s336
        %p338 = scmp.lt.s32.totalorder %s29, 1
        %s339 = scalar_select %p338, %s29, 1
        %s340 = smul.addr %s339, 16
        %s341 = smul.addr %s340, 8
        %s342 = scalar_lea.vmem %s1, %s341
        %p343 = scmp.lt.s32.totalorder %s29, 1
        %s344 = scalar_select %p343, %s29, 1
        %s345 = scalar_lea.vmem %s2, %s344
        %v346 = vld [vmem:[%s337] sm:$0xff]
        %v347 = vld [vmem:[%s342] sm:$0xff]
        %v348 = vld [vmem:[%s342 + $0x8] sm:$0xff]
        %v349 = vld [vmem:[%s342 + $0x10] sm:$0xff]
        %v350 = vld [vmem:[%s342 + $0x18] sm:$0xff]
        %v351 = vld [vmem:[%s342 + $0x20] sm:$0xff]
        %v352 = vld [vmem:[%s342 + $0x28] sm:$0xff]
        %v353 = vld [vmem:[%s342 + $0x30] sm:$0xff]
        %v354 = vld [vmem:[%s342 + $0x38] sm:$0xff]
        %v355 = vld [vmem:[%s342 + $0x40] sm:$0xff]
        %v356 = vld [vmem:[%s342 + $0x48] sm:$0xff]
        %v357 = vld [vmem:[%s342 + $0x50] sm:$0xff]
        %v358 = vld [vmem:[%s342 + $0x58] sm:$0xff]
        %v359 = vld [vmem:[%s342 + $0x60] sm:$0xff]
        %v360 = vld [vmem:[%s342 + $0x68] sm:$0xff]
        %v361 = vld [vmem:[%s342 + $0x70] sm:$0xff]
        %v362 = vld [vmem:[%s342 + $0x78] sm:$0xff]
        %v363 = vld [vmem:[%s3] sm:$0xff]
        %v364 = vld [vmem:[%s3 + $0x8] sm:$0xff]
        %vm365 = vcmask 130048
        %v367 = vsel %vm365, %v346, 0
        %369 = vmatprep.subr.mxu0 0.0
        %370 = vmatpush1.msra.mxu0 %v363
        %371 = vmatprep.subr.mxu0 0.0
        %372 = vmatpush1.msra.mxu0 %v364
        %373 = vmatprep.subr.mxu0 0.0
        %374 = vmatpush1.msra.mxu0 0.0
        %375 = vmatprep.subr.mxu0 0.0
        %376 = vmatpush1.msra.mxu0 0.0
        %377 = vmatprep.subr.mxu0 0.0
        %378 = vmatpush1.msra.mxu0 0.0
        %379 = vmatprep.subr.mxu0 0.0
        %380 = vmatpush1.msra.mxu0 0.0
        %381 = vmatprep.subr.mxu0 0.0
        %382 = vmatpush1.msra.mxu0 0.0
        %383 = vmatprep.subr.mxu0 0.0
        %384 = vmatpush1.msra.mxu0 0.0
        %385 = vmatprep.subr.mxu0 0.0
        %386 = vmatpush1.msra.mxu0 0.0
        %387 = vmatprep.subr.mxu0 0.0
        %388 = vmatpush1.msra.mxu0 0.0
        %389 = vmatprep.subr.mxu0 0.0
        %390 = vmatpush1.msra.mxu0 0.0
        %391 = vmatprep.subr.mxu0 0.0
        %392 = vmatpush1.msra.mxu0 0.0
        %393 = vmatprep.subr.mxu0 0.0
        %394 = vmatpush1.msra.mxu0 0.0
        %395 = vmatprep.subr.mxu0 0.0
        %396 = vmatpush1.msra.mxu0 0.0
        %397 = vmatprep.subr.mxu0 0.0
        %398 = vmatpush1.msra.mxu0 0.0
        %399 = vmatprep.subr.mxu0 0.0
        %400 = vmatpush1.msra.mxu0 0.0
        %401 = vmatprep.subr.mxu0 0.0
        %402 = vmatpush1.msra.mxu0 0.0
        %403 = vmatprep.subr.mxu0 0.0
        %404 = vmatpush1.msra.mxu0 0.0
        %405 = vmatprep.subr.mxu0 0.0
        %406 = vmatpush1.msra.mxu0 0.0
        %407 = vmatprep.subr.mxu0 0.0
        %408 = vmatpush1.msra.mxu0 0.0
        %409 = vmatprep.subr.mxu0 0.0
        %410 = vmatpush1.msra.mxu0 0.0
        %411 = vmatprep.subr.mxu0 0.0
        %412 = vmatpush1.msra.mxu0 0.0
        %413 = vmatprep.subr.mxu0 0.0
        %414 = vmatpush1.msra.mxu0 0.0
        %415 = vmatprep.subr.mxu0 0.0
        %416 = vmatpush1.msra.mxu0 0.0
        %417 = vmatprep.subr.mxu0 0.0
        %418 = vmatpush1.msra.mxu0 0.0
        %419 = vmatprep.subr.mxu0 0.0
        %420 = vmatpush1.msra.mxu0 0.0
        %421 = vmatprep.subr.mxu0 0.0
        %422 = vmatpush1.msra.mxu0 0.0
        %423 = vmatprep.subr.mxu0 0.0
        %424 = vmatpush1.msra.mxu0 0.0
        %425 = vmatprep.subr.mxu0 0.0
        %426 = vmatpush1.msra.mxu0 0.0
        %427 = vmatprep.subr.mxu0 0.0
        %428 = vmatpush1.msra.mxu0 0.0
        %429 = vmatprep.subr.mxu0 0.0
        %430 = vmatpush1.msra.mxu0 0.0
        %431 = vmatprep.subr.mxu0 0.0
        %432 = vmatpush1.msra.mxu0 0.0
        %433 = vmatprep.mubr.f32.mxu0 0.0
        %434 = vmatmul.mubr.f32.gmra.mrb[0].mxu0 %v367
        %v435 = vpop.f32.mrb[0].mxu0
        %v436 = vadd.f32 0.0, %v435
        %v437 = vpop.f32.mrb[0].mxu0
        %438 = vdwg.mxu0
        %v439 = vld [vmem:[%s5] sm:$0xff]
        %v440 = vld [vmem:[%s5 + $0x8] sm:$0xff]
        %441 = vmatprep.subr.mxu0 0.0
        %442 = vmatpush1.msra.mxu0 %v439
        %443 = vmatprep.subr.mxu0 0.0
        %444 = vmatpush1.msra.mxu0 %v440
        %445 = vmatprep.subr.mxu0 0.0
        %446 = vmatpush1.msra.mxu0 0.0
        %447 = vmatprep.subr.mxu0 0.0
        %448 = vmatpush1.msra.mxu0 0.0
        %449 = vmatprep.subr.mxu0 0.0
        %450 = vmatpush1.msra.mxu0 0.0
        %451 = vmatprep.subr.mxu0 0.0
        %452 = vmatpush1.msra.mxu0 0.0
        %453 = vmatprep.subr.mxu0 0.0
        %454 = vmatpush1.msra.mxu0 0.0
        %455 = vmatprep.subr.mxu0 0.0
        %456 = vmatpush1.msra.mxu0 0.0
        %457 = vmatprep.subr.mxu0 0.0
        %458 = vmatpush1.msra.mxu0 0.0
        %459 = vmatprep.subr.mxu0 0.0
        %460 = vmatpush1.msra.mxu0 0.0
        %461 = vmatprep.subr.mxu0 0.0
        %462 = vmatpush1.msra.mxu0 0.0
        %463 = vmatprep.subr.mxu0 0.0
        %464 = vmatpush1.msra.mxu0 0.0
        %465 = vmatprep.subr.mxu0 0.0
        %466 = vmatpush1.msra.mxu0 0.0
        %467 = vmatprep.subr.mxu0 0.0
        %468 = vmatpush1.msra.mxu0 0.0
        %469 = vmatprep.subr.mxu0 0.0
        %470 = vmatpush1.msra.mxu0 0.0
        %471 = vmatprep.subr.mxu0 0.0
        %472 = vmatpush1.msra.mxu0 0.0
        %473 = vmatprep.subr.mxu0 0.0
        %474 = vmatpush1.msra.mxu0 0.0
        %475 = vmatprep.subr.mxu0 0.0
        %476 = vmatpush1.msra.mxu0 0.0
        %477 = vmatprep.subr.mxu0 0.0
        %478 = vmatpush1.msra.mxu0 0.0
        %479 = vmatprep.subr.mxu0 0.0
        %480 = vmatpush1.msra.mxu0 0.0
        %481 = vmatprep.subr.mxu0 0.0
        %482 = vmatpush1.msra.mxu0 0.0
        %483 = vmatprep.subr.mxu0 0.0
        %484 = vmatpush1.msra.mxu0 0.0
        %485 = vmatprep.subr.mxu0 0.0
        %486 = vmatpush1.msra.mxu0 0.0
        %487 = vmatprep.subr.mxu0 0.0
        %488 = vmatpush1.msra.mxu0 0.0
        %489 = vmatprep.subr.mxu0 0.0
        %490 = vmatpush1.msra.mxu0 0.0
        %491 = vmatprep.subr.mxu0 0.0
        %492 = vmatpush1.msra.mxu0 0.0
        %493 = vmatprep.subr.mxu0 0.0
        %494 = vmatpush1.msra.mxu0 0.0
        %495 = vmatprep.subr.mxu0 0.0
        %496 = vmatpush1.msra.mxu0 0.0
        %497 = vmatprep.subr.mxu0 0.0
        %498 = vmatpush1.msra.mxu0 0.0
        %499 = vmatprep.subr.mxu0 0.0
        %500 = vmatpush1.msra.mxu0 0.0
        %501 = vmatprep.subr.mxu0 0.0
        %502 = vmatpush1.msra.mxu0 0.0
        %503 = vmatprep.subr.mxu0 0.0
        %504 = vmatpush1.msra.mxu0 0.0
        %505 = vmatprep.mubr.f32.mxu0 0.0
        %506 = vmatmul.mubr.f32.gmra.mrb[0].mxu0 %v367
        %v507 = vpop.f32.mrb[0].mxu0
        %v508 = vadd.f32 0.0, %v507
        %v509 = vpop.f32.mrb[0].mxu0
        %510 = vdwg.mxu0
        %v511 = vld [vmem:[%s345] sm:$0x1]
        %v513 = vlaneseq
        %v514 = vshrl.u32 %v513, 7
        %v515 = vsub.s32 0, %v514
        %v516 = vrot.slane %v511, %v515
        %vm518 = vcmask 261120
        %v520 = vsel %vm518, %v436, 0
        %v523 = vsel %vm518, %v347, 0
        %v526 = vsel %vm518, %v348, 0
        %v529 = vsel %vm518, %v349, 0
        %v532 = vsel %vm518, %v350, 0
        %v535 = vsel %vm518, %v351, 0
        %v538 = vsel %vm518, %v352, 0
        %v541 = vsel %vm518, %v353, 0
        %v544 = vsel %vm518, %v354, 0
        %v547 = vsel %vm518, %v355, 0
        %v550 = vsel %vm518, %v356, 0
        %v553 = vsel %vm518, %v357, 0
        %v556 = vsel %vm518, %v358, 0
        %v559 = vsel %vm518, %v359, 0
        %v562 = vsel %vm518, %v360, 0
        %v565 = vsel %vm518, %v361, 0
        %v568 = vsel %vm518, %v362, 0
        %570 = vmatprep.subr.mxu0 0.0
        %571 = vmatpush1.xpose.msra.mxu0 %v523
        %572 = vmatprep.subr.mxu0 0.0
        %573 = vmatpush1.xpose.msra.mxu0 %v526
        %574 = vmatprep.subr.mxu0 0.0
        %575 = vmatpush1.xpose.msra.mxu0 %v529
        %576 = vmatprep.subr.mxu0 0.0
        %577 = vmatpush1.xpose.msra.mxu0 %v532
        %578 = vmatprep.subr.mxu0 0.0
        %579 = vmatpush1.xpose.msra.mxu0 %v535
        %580 = vmatprep.subr.mxu0 0.0
        %581 = vmatpush1.xpose.msra.mxu0 %v538
        %582 = vmatprep.subr.mxu0 0.0
        %583 = vmatpush1.xpose.msra.mxu0 %v541
        %584 = vmatprep.subr.mxu0 0.0
        %585 = vmatpush1.xpose.msra.mxu0 %v544
        %586 = vmatprep.subr.mxu0 0.0
        %587 = vmatpush1.xpose.msra.mxu0 %v547
        %588 = vmatprep.subr.mxu0 0.0
        %589 = vmatpush1.xpose.msra.mxu0 %v550
        %590 = vmatprep.subr.mxu0 0.0
        %591 = vmatpush1.xpose.msra.mxu0 %v553
        %592 = vmatprep.subr.mxu0 0.0
        %593 = vmatpush1.xpose.msra.mxu0 %v556
        %594 = vmatprep.subr.mxu0 0.0
        %595 = vmatpush1.xpose.msra.mxu0 %v559
        %596 = vmatprep.subr.mxu0 0.0
        %597 = vmatpush1.xpose.msra.mxu0 %v562
        %598 = vmatprep.subr.mxu0 0.0
        %599 = vmatpush1.xpose.msra.mxu0 %v565
        %600 = vmatprep.subr.mxu0 0.0
        %601 = vmatpush1.xpose.msra.mxu0 %v568
        %602 = vmatprep.subr.mxu0 0.0
        %603 = vmatpush1.xpose.msra.mxu0 0.0
        %604 = vmatprep.subr.mxu0 0.0
        %605 = vmatpush1.xpose.msra.mxu0 0.0
        %606 = vmatprep.subr.mxu0 0.0
        %607 = vmatpush1.xpose.msra.mxu0 0.0
        %608 = vmatprep.subr.mxu0 0.0
        %609 = vmatpush1.xpose.msra.mxu0 0.0
        %610 = vmatprep.subr.mxu0 0.0
        %611 = vmatpush1.xpose.msra.mxu0 0.0
        %612 = vmatprep.subr.mxu0 0.0
        %613 = vmatpush1.xpose.msra.mxu0 0.0
        %614 = vmatprep.subr.mxu0 0.0
        %615 = vmatpush1.xpose.msra.mxu0 0.0
        %616 = vmatprep.subr.mxu0 0.0
        %617 = vmatpush1.xpose.msra.mxu0 0.0
        %618 = vmatprep.subr.mxu0 0.0
        %619 = vmatpush1.xpose.msra.mxu0 0.0
        %620 = vmatprep.subr.mxu0 0.0
        %621 = vmatpush1.xpose.msra.mxu0 0.0
        %622 = vmatprep.subr.mxu0 0.0
        %623 = vmatpush1.xpose.msra.mxu0 0.0
        %624 = vmatprep.subr.mxu0 0.0
        %625 = vmatpush1.xpose.msra.mxu0 0.0
        %626 = vmatprep.subr.mxu0 0.0
        %627 = vmatpush1.xpose.msra.mxu0 0.0
        %628 = vmatprep.subr.mxu0 0.0
        %629 = vmatpush1.xpose.msra.mxu0 0.0
        %630 = vmatprep.subr.mxu0 0.0
        %631 = vmatpush1.xpose.msra.mxu0 0.0
        %632 = vmatprep.subr.mxu0 0.0
        %633 = vmatpush1.xpose.msra.mxu0 0.0
        %634 = vmatprep.mubr.f32.mxu0 0.0
        %635 = vmatmul.mubr.f32.gmra.mrb[0].mxu0 %v520
        %v636 = vpop.f32.mrb[0].mxu0
        %v637 = vadd.f32 %v516, %v636
        %v638 = vpop.f32.mrb[0].mxu0
        %639 = vdwg.mxu0
        %640 = vmax.xlane.f32.xlu0 %v637
        %v641 = vpop.xlane.xlu0 %640
        %v642 = vsub.f32 %v637, %v641
        %v643 = vmul.f32 %v642, 1.442695
        %v644 = vpow.pop %v643
        %645 = vadd.xlane.f32.xlu0 %v644
        %v646 = vpop.xlane.xlu0 %645
        %v647 = vrcp.pop %v646
        %v648 = vmul.f32 %v644, %v647
        %649 = vmatprep.subr.mxu0 0.0
        %650 = vmatpush1.msra.mxu0 %v347
        %651 = vmatprep.subr.mxu0 0.0
        %652 = vmatpush1.msra.mxu0 %v348
        %653 = vmatprep.subr.mxu0 0.0
        %654 = vmatpush1.msra.mxu0 %v349
        %655 = vmatprep.subr.mxu0 0.0
        %656 = vmatpush1.msra.mxu0 %v350
        %657 = vmatprep.subr.mxu0 0.0
        %658 = vmatpush1.msra.mxu0 %v351
        %659 = vmatprep.subr.mxu0 0.0
        %660 = vmatpush1.msra.mxu0 %v352
        %661 = vmatprep.subr.mxu0 0.0
        %662 = vmatpush1.msra.mxu0 %v353
        %663 = vmatprep.subr.mxu0 0.0
        %664 = vmatpush1.msra.mxu0 %v354
        %665 = vmatprep.subr.mxu0 0.0
        %666 = vmatpush1.msra.mxu0 %v355
        %667 = vmatprep.subr.mxu0 0.0
        %668 = vmatpush1.msra.mxu0 %v356
        %669 = vmatprep.subr.mxu0 0.0
        %670 = vmatpush1.msra.mxu0 %v357
        %671 = vmatprep.subr.mxu0 0.0
        %672 = vmatpush1.msra.mxu0 %v358
        %673 = vmatprep.subr.mxu0 0.0
        %674 = vmatpush1.msra.mxu0 %v359
        %675 = vmatprep.subr.mxu0 0.0
        %676 = vmatpush1.msra.mxu0 %v360
        %677 = vmatprep.subr.mxu0 0.0
        %678 = vmatpush1.msra.mxu0 %v361
        %679 = vmatprep.subr.mxu0 0.0
        %680 = vmatpush1.msra.mxu0 %v362
        %681 = vmatprep.subr.mxu0 0.0
        %682 = vmatpush1.msra.mxu0 0.0
        %683 = vmatprep.subr.mxu0 0.0
        %684 = vmatpush1.msra.mxu0 0.0
        %685 = vmatprep.subr.mxu0 0.0
        %686 = vmatpush1.msra.mxu0 0.0
        %687 = vmatprep.subr.mxu0 0.0
        %688 = vmatpush1.msra.mxu0 0.0
        %689 = vmatprep.subr.mxu0 0.0
        %690 = vmatpush1.msra.mxu0 0.0
        %691 = vmatprep.subr.mxu0 0.0
        %692 = vmatpush1.msra.mxu0 0.0
        %693 = vmatprep.subr.mxu0 0.0
        %694 = vmatpush1.msra.mxu0 0.0
        %695 = vmatprep.subr.mxu0 0.0
        %696 = vmatpush1.msra.mxu0 0.0
        %697 = vmatprep.subr.mxu0 0.0
        %698 = vmatpush1.msra.mxu0 0.0
        %699 = vmatprep.subr.mxu0 0.0
        %700 = vmatpush1.msra.mxu0 0.0
        %701 = vmatprep.subr.mxu0 0.0
        %702 = vmatpush1.msra.mxu0 0.0
        %703 = vmatprep.subr.mxu0 0.0
        %704 = vmatpush1.msra.mxu0 0.0
        %705 = vmatprep.subr.mxu0 0.0
        %706 = vmatpush1.msra.mxu0 0.0
        %707 = vmatprep.subr.mxu0 0.0
        %708 = vmatpush1.msra.mxu0 0.0
        %709 = vmatprep.subr.mxu0 0.0
        %710 = vmatpush1.msra.mxu0 0.0
        %711 = vmatprep.subr.mxu0 0.0
        %712 = vmatpush1.msra.mxu0 0.0
        %713 = vmatprep.mubr.f32.mxu0 0.0
        %714 = vmatmul.mubr.f32.gmra.mrb[0].mxu0 %v648
        %v715 = vpop.f32.mrb[0].mxu0
        %v716 = vadd.f32 0.0, %v715
        %v717 = vpop.f32.mrb[0].mxu0
        %718 = vdwg.mxu0
        %v719 = vld [vmem:[%s4] sm:$0xff]
        %v720 = vld [vmem:[%s4 + $0x8] sm:$0xff]
        %v721 = vld [vmem:[%s4 + $0x10] sm:$0xff]
        %v722 = vld [vmem:[%s4 + $0x18] sm:$0xff]
        %v724 = vsel %vm518, %v716, 0
        %726 = vmatprep.subr.mxu0 0.0
        %727 = vmatpush1.msra.mxu0 %v719
        %728 = vmatprep.subr.mxu0 0.0
        %729 = vmatpush1.msra.mxu0 %v720
        %730 = vmatprep.subr.mxu0 0.0
        %731 = vmatpush1.msra.mxu0 %v721
        %732 = vmatprep.subr.mxu0 0.0
        %733 = vmatpush1.msra.mxu0 %v722
        %734 = vmatprep.subr.mxu0 0.0
        %735 = vmatpush1.msra.mxu0 0.0
        %736 = vmatprep.subr.mxu0 0.0
        %737 = vmatpush1.msra.mxu0 0.0
        %738 = vmatprep.subr.mxu0 0.0
        %739 = vmatpush1.msra.mxu0 0.0
        %740 = vmatprep.subr.mxu0 0.0
        %741 = vmatpush1.msra.mxu0 0.0
        %742 = vmatprep.subr.mxu0 0.0
        %743 = vmatpush1.msra.mxu0 0.0
        %744 = vmatprep.subr.mxu0 0.0
        %745 = vmatpush1.msra.mxu0 0.0
        %746 = vmatprep.subr.mxu0 0.0
        %747 = vmatpush1.msra.mxu0 0.0
        %748 = vmatprep.subr.mxu0 0.0
        %749 = vmatpush1.msra.mxu0 0.0
        %750 = vmatprep.subr.mxu0 0.0
        %751 = vmatpush1.msra.mxu0 0.0
        %752 = vmatprep.subr.mxu0 0.0
        %753 = vmatpush1.msra.mxu0 0.0
        %754 = vmatprep.subr.mxu0 0.0
        %755 = vmatpush1.msra.mxu0 0.0
        %756 = vmatprep.subr.mxu0 0.0
        %757 = vmatpush1.msra.mxu0 0.0
        %758 = vmatprep.subr.mxu0 0.0
        %759 = vmatpush1.msra.mxu0 0.0
        %760 = vmatprep.subr.mxu0 0.0
        %761 = vmatpush1.msra.mxu0 0.0
        %762 = vmatprep.subr.mxu0 0.0
        %763 = vmatpush1.msra.mxu0 0.0
        %764 = vmatprep.subr.mxu0 0.0
        %765 = vmatpush1.msra.mxu0 0.0
        %766 = vmatprep.subr.mxu0 0.0
        %767 = vmatpush1.msra.mxu0 0.0
        %768 = vmatprep.subr.mxu0 0.0
        %769 = vmatpush1.msra.mxu0 0.0
        %770 = vmatprep.subr.mxu0 0.0
        %771 = vmatpush1.msra.mxu0 0.0
        %772 = vmatprep.subr.mxu0 0.0
        %773 = vmatpush1.msra.mxu0 0.0
        %774 = vmatprep.subr.mxu0 0.0
        %775 = vmatpush1.msra.mxu0 0.0
        %776 = vmatprep.subr.mxu0 0.0
        %777 = vmatpush1.msra.mxu0 0.0
        %778 = vmatprep.subr.mxu0 0.0
        %779 = vmatpush1.msra.mxu0 0.0
        %780 = vmatprep.subr.mxu0 0.0
        %781 = vmatpush1.msra.mxu0 0.0
        %782 = vmatprep.subr.mxu0 0.0
        %783 = vmatpush1.msra.mxu0 0.0
        %784 = vmatprep.subr.mxu0 0.0
        %785 = vmatpush1.msra.mxu0 0.0
        %786 = vmatprep.subr.mxu0 0.0
        %787 = vmatpush1.msra.mxu0 0.0
        %788 = vmatprep.subr.mxu0 0.0
        %789 = vmatpush1.msra.mxu0 0.0
        %790 = vmatprep.mubr.f32.mxu0 0.0
        %791 = vmatmul.mubr.f32.gmra.mrb[0].mxu0 %v724
        %v792 = vpop.f32.mrb[0].mxu0
        %v793 = vadd.f32 %v508, %v792
        %v794 = vpop.f32.mrb[0].mxu0
        %795 = vdwg.mxu0
        %v796 = vtanh.pop %v793
        %797 = vst [vmem:[%s323] sm:$0xff] %v796
        %798 = vst [vmem:[%s330] sm:$0xff] %v648
        %s799 = sand.u32 %s190, 1
        %s800 = scalar_lea.sflag [#allocation3], %s799
        %s801 = sand.u32 %s190, 1
        %s802 = smul.addr %s801, 8
        %s803 = scalar_lea.vmem [#allocation2], %s802
        %s804 = sand.u32 %s218, 1
        %s805 = scalar_lea.sflag [#allocation5], %s804
        %s806 = sand.u32 %s218, 1
        %s807 = smul.addr %s806, 8
        %s808 = scalar_lea.vmem [#allocation4], %s807
        // Predicated region
        $region45: #{tpu_custom_call.1} parent=43 // pred_check
          %p809 = pneg %p200
        $region46: #{tpu_custom_call.1} parent=43 // pred_check_branch
          %811 = sbr.rel (%p809) target = $region48
        $region47: #{tpu_custom_call.1} parent=43 // pred_region
          %s813 = ssub.s32 128, 128
          %814 = vsyncadd %s800, %s813
          %s815 = sadd.s32 %s30, %s29
          %s816 = smul.addr %s815, 128
          %s817 = scalar_lea.hbm %s6, %s816
          %s819 = sshll.u32 %s803, 4
          %s820 = int_to_ptr.vmem [resolvable:$true] %s819
          %822 = dma.vmem_to_hbm [thread:$0]  %s820, 128, %s817, %s800
        $region48: #{tpu_custom_call.1} parent=43 // pred_fallthru
          _
        // Predicated region
        $region49: #{tpu_custom_call.1} parent=43 // pred_check
          %p823 = pneg %p228
        $region50: #{tpu_custom_call.1} parent=43 // pred_check_branch
          %825 = sbr.rel (%p823) target = $region52
        $region51: #{tpu_custom_call.1} parent=43 // pred_region
          %s827 = ssub.s32 128, 128
          %828 = vsyncadd %s805, %s827
          %s829 = sadd.s32 %s30, %s29
          %s830 = smul.addr %s829, 128
          %s831 = scalar_lea.hbm %s7, %s830
          %s833 = sshll.u32 %s808, 4
          %s834 = int_to_ptr.vmem [resolvable:$true] %s833
          %836 = dma.vmem_to_hbm [thread:$0]  %s834, 128, %s831, %s805
        $region52: #{tpu_custom_call.1} parent=43 // pred_fallthru
          _
      $region44: #{tpu_custom_call.1} parent=5 // pred_fallthru
        _
      %p837 = scmp.le.s32.totalorder 2, %s20
      // Predicated region
      $region53: #{tpu_custom_call.1} parent=5 // pred_check
        %p838 = pneg %p837
      $region54: #{tpu_custom_call.1} parent=5 // pred_check_branch
        %840 = sbr.rel (%p838) target = $region56
      $region55: #{tpu_custom_call.1} parent=5 // pred_region
        %s841 = ssub.s32 %s20, 2
        // Predicated region
        $region57: #{tpu_custom_call.1} parent=55 // pred_check
          %p842 = pneg %p206
        $region58: #{tpu_custom_call.1} parent=55 // pred_check_branch
          %844 = sbr.rel (%p842) target = $region60
        $region59: #{tpu_custom_call.1} parent=55 // pred_region
          %s845 = sand.u32 %s191, 1
          %s846 = scalar_lea.sflag [#allocation3], %s845
          %s847 = sand.u32 %s191, 1
          %s848 = smul.addr %s847, 8
          %s849 = scalar_lea.vmem [#allocation2], %s848
          %850 = dma.done %s846, 128
        $region60: #{tpu_custom_call.1} parent=55 // pred_fallthru
          _
        // Predicated region
        $region61: #{tpu_custom_call.1} parent=55 // pred_check
          %p851 = pneg %p234
        $region62: #{tpu_custom_call.1} parent=55 // pred_check_branch
          %853 = sbr.rel (%p851) target = $region64
        $region63: #{tpu_custom_call.1} parent=55 // pred_region
          %s854 = sand.u32 %s219, 1
          %s855 = scalar_lea.sflag [#allocation5], %s854
          %s856 = sand.u32 %s219, 1
          %s857 = smul.addr %s856, 8
          %s858 = scalar_lea.vmem [#allocation4], %s857
          %859 = dma.done %s855, 128
        $region64: #{tpu_custom_call.1} parent=55 // pred_fallthru
          _
      $region56: #{tpu_custom_call.1} parent=5 // pred_fallthru
        _
    $region6: #{tpu_custom_call.1} parent=1 // loop_footer
      %s24 = sadd.s32 1, %s20
    $region7: #{tpu_custom_call.1} parent=1 // loop_footer_branch
      %19 = sbr.rel target = $region3
    $region8: #{tpu_custom_call.1} parent=1 // loop_exit
      _
    %860 = vsyncpa [#allocation3], 1
    %s861 = scalar_lea.sflag [#allocation3], 1
    %862 = vsyncpa %s861, 1
    %863 = vsyncpa [#allocation5], 1
    %s864 = scalar_lea.sflag [#allocation5], 1
    %865 = vsyncpa %s864, 1

</llo_original>
